<compile_context>
chip_gen: v7x
topology: tpu7x:2x2x1
jax: 0.10.0
libtpu: 0.0.40
codegen_flags: <defaults>
</compile_context>

<pallas_src>
import functools

import jax
import jax.numpy as jnp
from jax.experimental import pallas as pl
from jax.experimental.pallas import tpu as pltpu


def _lyapunov_kernel(x_ref, goal_ref, r_ref, o_ref, *, eps):
    # x_ref:    (TB, D)     state tile, natural layout, native dtype
    # goal_ref: (D, 1)      goal state (f32, resident)
    # r_ref:    (R_rows, D) R parameter (f32, resident)
    # o_ref:    (1, TB)     lane-dense Lyapunov values for this batch tile
    xt = x_ref[...].astype(jnp.float32).T            # in-kernel cast + transpose -> (D, TB)
    x0 = xt - goal_ref[...]                          # (D, TB), goal broadcast over lanes
    z = jnp.dot(r_ref[...], x0, preferred_element_type=jnp.float32)  # (R_rows, TB)
    o_ref[...] = (eps * jnp.sum(x0 * x0, axis=0, keepdims=True)
                  + jnp.sum(z * z, axis=0, keepdims=True))           # (1, TB)


def _default_batch_tile():
    """Per-generation tile: bigger chunks on v7x (3.2 TB/s HBM, 2 TCs)."""
    kind = ""
    try:
        kind = jax.devices()[0].device_kind.lower()
    except Exception:
        pass
    if "v7" in kind:
        return 32768
    return 16384


def quadratic_lyapunov(x, goal_state, R, eps, *, batch_tile=None):
    """V(x) = (x - x*)^T (eps*I + R^T R) (x - x*), returned as (B, 1) float32."""
    B, D = x.shape
    R_rows = R.shape[0]
    assert goal_state.shape == (D,)
    assert R.shape == (R_rows, D)

    if batch_tile is None:
        batch_tile = _default_batch_tile()

    # Parameters are tiny -> keep f32 (matches torch module dtype). x stays in
    # its native dtype (bf16 callers halve HBM traffic); cast happens in-kernel.
    goal2d = jnp.asarray(goal_state, jnp.float32).reshape(D, 1)
    Rf = jnp.asarray(R, jnp.float32)

    if B <= batch_tile:
        tile = B                                     # single step, block == full extent
    else:
        tile = max(128, (batch_tile // 128) * 128)   # lane tiles must be multiples of 128

    grid = (pl.cdiv(B, tile),)                       # partial final block handled by Pallas masking

    # Only raise scoped VMEM when the double-buffered x block gets large
    # (relevant for v5e's 16 MiB default with >=32K-lane tiles).
    x_block_bytes = tile * D * jnp.dtype(x.dtype).itemsize
    vmem_limit = None
    if 2 * x_block_bytes > (8 << 20):
        vmem_limit = min(48 << 20, 4 * x_block_bytes + (16 << 20))

    kernel = functools.partial(_lyapunov_kernel, eps=float(eps))

    out = pl.pallas_call(
        kernel,
        out_shape=jax.ShapeDtypeStruct((1, B), jnp.float32),
        grid_spec=pltpu.PrefetchScalarGridSpec(
            num_scalar_prefetch=0,
            grid=grid,
            in_specs=[
                pl.BlockSpec((tile, D), lambda i: (i, 0)),       # x tile, natural layout
                pl.BlockSpec((D, 1), lambda i: (0, 0)),          # goal (resident)
                pl.BlockSpec((R_rows, D), lambda i: (0, 0)),     # R    (resident)
            ],
            out_specs=pl.BlockSpec((1, tile), lambda i: (0, i)),  # lane-dense output
        ),
        compiler_params=pltpu.CompilerParams(
            dimension_semantics=("parallel",),
            vmem_limit_bytes=vmem_limit,
        ),
    )(x, goal2d, Rf)

    # (1, B) -> (B, 1); same flat ordering, so this is just the batch column.
    return out.reshape(B, 1)


def _reference(x, goal_state, R, eps):
    x0 = jnp.asarray(x, jnp.float32) - goal_state[None, :]
    Q = eps * jnp.eye(x.shape[1], dtype=jnp.float32) + R.T @ R
    return jnp.sum(x0 * (x0 @ Q), axis=1, keepdims=True)


if __name__ == "__main__":
    # Module-config-style constants (deterministic, in-script).
    X_DIM = 16      # state dimension
    R_ROWS = 4      # rows of R
    R_SCALE = 2.0
    EPS = 0.1

    key = jax.random.PRNGKey(0)
    kx, kg, kr, kx2, kx3 = jax.random.split(key, 5)

    goal_state = jax.random.normal(kg, (X_DIM,), dtype=jnp.float32)
    # Matches the torch init: (rand(R_rows, x_dim) - 0.5) * R_scale
    R = (jax.random.uniform(kr, (R_ROWS, X_DIM), dtype=jnp.float32) - 0.5) * R_SCALE

    # --- small batch (single grid step, block == full array) ---
    B = 16
    x = jax.random.normal(kx, (B, X_DIM), dtype=jnp.float32)
    lyap = jax.block_until_ready(quadratic_lyapunov(x, goal_state, R, EPS))
    ref = _reference(x, goal_state, R, EPS)
    assert lyap.shape == (B, 1)
    assert jnp.allclose(lyap, ref, rtol=1e-5, atol=1e-5), (lyap, ref)

    # --- ragged batch (multi-step grid + masked partial final block, no pad) ---
    B2 = 300
    x2 = jax.random.normal(kx2, (B2, X_DIM), dtype=jnp.float32)
    lyap2 = jax.block_until_ready(
        quadratic_lyapunov(x2, goal_state, R, EPS, batch_tile=128))
    ref2 = _reference(x2, goal_state, R, EPS)
    assert lyap2.shape == (B2, 1)
    assert jnp.allclose(lyap2, ref2, rtol=1e-5, atol=1e-5), (lyap2, ref2)

    # --- native bf16 input path (cast happens in-kernel, halves HBM reads) ---
    B3 = 64
    x3 = jax.random.normal(kx3, (B3, X_DIM), dtype=jnp.float32).astype(jnp.bfloat16)
    lyap3 = jax.block_until_ready(quadratic_lyapunov(x3, goal_state, R, EPS))
    ref3 = _reference(x3.astype(jnp.float32), goal_state, R, EPS)
    assert lyap3.shape == (B3, 1)
    assert jnp.allclose(lyap3, ref3, rtol=1e-4, atol=1e-4), (lyap3, ref3)

    print("KERNEL_OK")
</pallas_src>

<mosaic_0001>
module attributes {stable_mosaic.version = 11 : i64} {
  func.func @_lyapunov_kernel(%arg0: i32, %arg1: memref<16x16xf32, #tpu.memory_space<vmem>>, %arg2: memref<16x1xf32, #tpu.memory_space<vmem>>, %arg3: memref<4x16xf32, #tpu.memory_space<vmem>>, %arg4: memref<1x16xf32, #tpu.memory_space<vmem>>) attributes {dimension_semantics = [#tpu.dimension_semantics<parallel>], iteration_bounds = array<i64: 1>, scalar_prefetch = 0 : i64, scratch_operands = 0 : i64, tpu.core_type = #tpu.core_type<tc>, window_params = [{transform_indices = @transform_0, window_bounds = array<i64: 16, 16>}, {pipeline_mode = #tpu.pipeline_mode<synchronous>, transform_indices = @transform_1, window_bounds = array<i64: 16, 1>}, {pipeline_mode = #tpu.pipeline_mode<synchronous>, transform_indices = @transform_2, window_bounds = array<i64: 4, 16>}, {transform_indices = @transform_3, window_bounds = array<i64: 1, 16>}]} {
    %c0 = arith.constant 0 : index
    %c0_0 = arith.constant 0 : index
    %0 = vector.load %arg1[%c0, %c0_0] : memref<16x16xf32, #tpu.memory_space<vmem>>, vector<16x16xf32>
    %1 = tpu.transpose %0, [1, 0] : vector<16x16xf32> -> vector<16x16xf32>
    %c0_1 = arith.constant 0 : index
    %c0_2 = arith.constant 0 : index
    %2 = vector.load %arg2[%c0_1, %c0_2] : memref<16x1xf32, #tpu.memory_space<vmem>>, vector<16x1xf32>
    %3 = vector.broadcast %2 : vector<16x1xf32> to vector<16x16xf32>
    %4 = arith.subf %1, %3 : vector<16x16xf32>
    %c0_3 = arith.constant 0 : index
    %c0_4 = arith.constant 0 : index
    %5 = vector.load %arg3[%c0_3, %c0_4] : memref<4x16xf32, #tpu.memory_space<vmem>>, vector<4x16xf32>
    %cst = arith.constant dense<0.000000e+00> : vector<4x16xf32>
    %6 = tpu.matmul %5, %4, %cst {dimension_numbers = #tpu.dot_dimension_numbers<[1], [0], [0], [1], [0, 0, 1, 1], [], []>} : vector<4x16xf32>, vector<16x16xf32>, vector<4x16xf32> -> vector<4x16xf32>
    %7 = arith.mulf %4, %4 : vector<16x16xf32>
    %cst_5 = arith.constant dense<0.000000e+00> : vector<16xf32>
    %8 = vector.multi_reduction <add>, %7, %cst_5 [0] : vector<16x16xf32> to vector<16xf32>
    %9 = vector.shape_cast %8 : vector<16xf32> to vector<1x16xf32>
    %cst_6 = arith.constant 1.000000e-01 : f32
    %10 = vector.broadcast %cst_6 : f32 to vector<1x16xf32>
    %11 = arith.mulf %10, %9 : vector<1x16xf32>
    %12 = arith.mulf %6, %6 : vector<4x16xf32>
    %cst_7 = arith.constant dense<0.000000e+00> : vector<16xf32>
    %13 = vector.multi_reduction <add>, %12, %cst_7 [0] : vector<4x16xf32> to vector<16xf32>
    %14 = vector.shape_cast %13 : vector<16xf32> to vector<1x16xf32>
    %15 = arith.addf %11, %14 : vector<1x16xf32>
    %c0_8 = arith.constant 0 : index
    %c0_9 = arith.constant 0 : index
    %16 = vector.load %arg4[%c0_8, %c0_9] : memref<1x16xf32, #tpu.memory_space<vmem>>, vector<1x16xf32>
    tpu.vector_store %arg4[%c0_8, %c0_9], %15 {strides = array<i32>} : memref<1x16xf32, #tpu.memory_space<vmem>>, vector<1x16xf32>,
    return
  }
  func.func @transform_0(%arg0: i32) -> (i32, i32) {
    %c0_i32 = arith.constant 0 : i32
    %c0_i32_0 = arith.constant 0 : i32
    return %arg0, %c0_i32 : i32, i32
  }
  func.func @transform_1(%arg0: i32) -> (i32, i32) {
    %c0_i32 = arith.constant 0 : i32
    %c0_i32_0 = arith.constant 0 : i32
    %c0_i32_1 = arith.constant 0 : i32
    return %c0_i32, %c0_i32_0 : i32, i32
  }
  func.func @transform_2(%arg0: i32) -> (i32, i32) {
    %c0_i32 = arith.constant 0 : i32
    %c0_i32_0 = arith.constant 0 : i32
    %c0_i32_1 = arith.constant 0 : i32
    return %c0_i32, %c0_i32_0 : i32, i32
  }
  func.func @transform_3(%arg0: i32) -> (i32, i32) {
    %c0_i32 = arith.constant 0 : i32
    %c0_i32_0 = arith.constant 0 : i32
    return %c0_i32, %arg0 : i32, i32
  }
}

</mosaic_0001>

<llo_original>
// kernel: tpu_custom_call.1
$region0: #{tpu_custom_call.1}
  #allocation0 [shape = 'u32[]', space=smem, size = 0x4, offset = 0x4, fixed_abs, tag = 'smem constant byte address 0x4 - core index']
  #allocation1 [shape = 'u32[144,128]{1,0:T(1,128)}', space=vmem, size = 0x12000, scoped, tag = 'internal scratch']
  %s0 = inlined_call_operand.vmem [shape: f32[16,16], index: 0, kind: input, shape index: {}]
  %s1 = inlined_call_operand.vmem [shape: f32[16,1], index: 1, kind: input, shape index: {}]
  %s2 = inlined_call_operand.vmem [shape: f32[4,16], index: 2, kind: input, shape index: {}]
  %s3 = inlined_call_operand.hbm [shape: f32[1,16], index: 3, kind: output, shape index: {}]
  %s4 = sld [smem:[#allocation0]]
  $region22: #{tpu_custom_call.1} parent=0
    _
  %s6 = ssub.s32 1, %s4
  %s7 = scalar_select 0, %s6, %s4
  $region1: #{tpu_custom_call.1} parent=0
    #allocation2 [shape = 'u8[512]{0}', space=vmem, size = 0x400, scoped, tag = 'output window, operand 0, single buffered']
    #allocation3 [shape = 's32[1]{0}', space=sflag, size = 0x4, scoped, tag = 'scoped memory for tpu_custom_call.1']
    %8 = vsyncpa [#allocation3], 0
    // Predicated region
    $region2: #{tpu_custom_call.1} parent=1 // pred_check
      _
    $region3: #{tpu_custom_call.1} parent=1 // pred_check_branch
      %10 = sbr.rel (0) target = $region5
    $region4: #{tpu_custom_call.1} parent=1 // pred_region
      _
    $region5: #{tpu_custom_call.1} parent=1 // pred_fallthru
      _
    // Predicated region
    $region6: #{tpu_custom_call.1} parent=1 // pred_check
      _
    $region7: #{tpu_custom_call.1} parent=1 // pred_check_branch
      %12 = sbr.rel (0) target = $region9
    $region8: #{tpu_custom_call.1} parent=1 // pred_region
      _
    $region9: #{tpu_custom_call.1} parent=1 // pred_fallthru
      _
    // Predicated region
    $region10: #{tpu_custom_call.1} parent=1 // pred_check
      _
    $region11: #{tpu_custom_call.1} parent=1 // pred_check_branch
      %14 = sbr.rel (0) target = $region13
    $region12: #{tpu_custom_call.1} parent=1 // pred_region
      _
    $region13: #{tpu_custom_call.1} parent=1 // pred_fallthru
      _
    %v15 = vld [vmem:[%s0] sm:$0xff]
    %v16 = vld [vmem:[%s0 + $0x8] sm:$0xff]
    %17 = vxpose.xlu0.b32.start [1/16] %v15, 128
    %18 = vxpose.xlu0.b32.cont [2/16] %v16, 128
    %19 = vxpose.xlu0.b32.cont [3/16] 0.0, 128
    %20 = vxpose.xlu0.b32.cont [4/16] 0.0, 128
    %21 = vxpose.xlu0.b32.cont [5/16] 0.0, 128
    %22 = vxpose.xlu0.b32.cont [6/16] 0.0, 128
    %23 = vxpose.xlu0.b32.cont [7/16] 0.0, 128
    %24 = vxpose.xlu0.b32.cont [8/16] 0.0, 128
    %25 = vxpose.xlu0.b32.cont [9/16] 0.0, 128
    %26 = vxpose.xlu0.b32.cont [10/16] 0.0, 128
    %27 = vxpose.xlu0.b32.cont [11/16] 0.0, 128
    %28 = vxpose.xlu0.b32.cont [12/16] 0.0, 128
    %29 = vxpose.xlu0.b32.cont [13/16] 0.0, 128
    %30 = vxpose.xlu0.b32.cont [14/16] 0.0, 128
    %31 = vxpose.xlu0.b32.cont [15/16] 0.0, 128
    %32 = vxpose.xlu0.b32.end [16/16] 0.0, 128
    %v33 = vpop.trf.xlu0
    %v34 = vpop.trf.xlu0
    %v35 = vpop.trf.xlu0
    %v36 = vpop.trf.xlu0
    %v37 = vpop.trf.xlu0
    %v38 = vpop.trf.xlu0
    %v39 = vpop.trf.xlu0
    %v40 = vpop.trf.xlu0
    %v41 = vpop.trf.xlu0
    %v42 = vpop.trf.xlu0
    %v43 = vpop.trf.xlu0
    %v44 = vpop.trf.xlu0
    %v45 = vpop.trf.xlu0
    %v46 = vpop.trf.xlu0
    %v47 = vpop.trf.xlu0
    %v48 = vpop.trf.xlu0
    %v49 = vld [vmem:[%s1] sm:$0xff]
    %v50 = vld [vmem:[%s1 + $0x8] sm:$0xff]
    %52 = vset.pattern.permute.xlu0 0
    %53 = vperm.xlu0 %52, %v49
    %v54 = vpop.permute.xlu0 %53
    %57 = vset.pattern.permute.xlu0 0
    %58 = vperm.xlu0 %57, %v50
    %v59 = vpop.permute.xlu0 %58
    %v61 = vsub.f32 %v33, %v54
    %v62 = vsub.f32 %v34, %v59
    %v63 = vld [vmem:[%s2] sm:$0xf]
    %vm64 = vcmask 130048
    %v66 = vsel %vm64, %v63, 0
    %68 = vmatprep.subr.mxu0 0.0
    %69 = vmatpush1.msra.mxu0 %v61
    %70 = vmatprep.subr.mxu0 0.0
    %71 = vmatpush1.msra.mxu0 %v62
    %72 = vmatprep.subr.mxu0 0.0
    %73 = vmatpush1.msra.mxu0 0.0
    %74 = vmatprep.subr.mxu0 0.0
    %75 = vmatpush1.msra.mxu0 0.0
    %76 = vmatprep.subr.mxu0 0.0
    %77 = vmatpush1.msra.mxu0 0.0
    %78 = vmatprep.subr.mxu0 0.0
    %79 = vmatpush1.msra.mxu0 0.0
    %80 = vmatprep.subr.mxu0 0.0
    %81 = vmatpush1.msra.mxu0 0.0
    %82 = vmatprep.subr.mxu0 0.0
    %83 = vmatpush1.msra.mxu0 0.0
    %84 = vmatprep.subr.mxu0 0.0
    %85 = vmatpush1.msra.mxu0 0.0
    %86 = vmatprep.subr.mxu0 0.0
    %87 = vmatpush1.msra.mxu0 0.0
    %88 = vmatprep.subr.mxu0 0.0
    %89 = vmatpush1.msra.mxu0 0.0
    %90 = vmatprep.subr.mxu0 0.0
    %91 = vmatpush1.msra.mxu0 0.0
    %92 = vmatprep.subr.mxu0 0.0
    %93 = vmatpush1.msra.mxu0 0.0
    %94 = vmatprep.subr.mxu0 0.0
    %95 = vmatpush1.msra.mxu0 0.0
    %96 = vmatprep.subr.mxu0 0.0
    %97 = vmatpush1.msra.mxu0 0.0
    %98 = vmatprep.subr.mxu0 0.0
    %99 = vmatpush1.msra.mxu0 0.0
    %100 = vmatprep.subr.mxu0 0.0
    %101 = vmatpush1.msra.mxu0 0.0
    %102 = vmatprep.subr.mxu0 0.0
    %103 = vmatpush1.msra.mxu0 0.0
    %104 = vmatprep.subr.mxu0 0.0
    %105 = vmatpush1.msra.mxu0 0.0
    %106 = vmatprep.subr.mxu0 0.0
    %107 = vmatpush1.msra.mxu0 0.0
    %108 = vmatprep.subr.mxu0 0.0
    %109 = vmatpush1.msra.mxu0 0.0
    %110 = vmatprep.subr.mxu0 0.0
    %111 = vmatpush1.msra.mxu0 0.0
    %112 = vmatprep.subr.mxu0 0.0
    %113 = vmatpush1.msra.mxu0 0.0
    %114 = vmatprep.subr.mxu0 0.0
    %115 = vmatpush1.msra.mxu0 0.0
    %116 = vmatprep.subr.mxu0 0.0
    %117 = vmatpush1.msra.mxu0 0.0
    %118 = vmatprep.subr.mxu0 0.0
    %119 = vmatpush1.msra.mxu0 0.0
    %120 = vmatprep.subr.mxu0 0.0
    %121 = vmatpush1.msra.mxu0 0.0
    %122 = vmatprep.subr.mxu0 0.0
    %123 = vmatpush1.msra.mxu0 0.0
    %124 = vmatprep.subr.mxu0 0.0
    %125 = vmatpush1.msra.mxu0 0.0
    %126 = vmatprep.subr.mxu0 0.0
    %127 = vmatpush1.msra.mxu0 0.0
    %128 = vmatprep.subr.mxu0 0.0
    %129 = vmatpush1.msra.mxu0 0.0
    %130 = vmatprep.subr.mxu0 0.0
    %131 = vmatpush1.msra.mxu0 0.0
    %132 = vmatprep.mubr.f32.mxu0 0.0
    %133 = vmatmul.mubr.f32.gmra.mrb[0].mxu0 %v66
    %v134 = vpop.f32.mrb[0].mxu0
    %v135 = vadd.f32 0.0, %v134
    %v136 = vpop.f32.mrb[0].mxu0
    %137 = vdwg.mxu0
    %v138 = vmul.f32 %v61, %v61
    %v139 = vmul.f32 %v62, %v62
    %v140 = vsel %vm64, %v138, 0.0
    %v141 = vsel %vm64, %v139, 0.0
    %v142 = vadd.f32 %v140, %v141
    %v143 = vrot.slane %v142, 4
    %v144 = vadd.f32 %v142, %v143
    %v145 = vrot.slane %v144, 2
    %v146 = vadd.f32 %v144, %v145
    %v147 = vrot.slane %v146, 1
    %v148 = vadd.f32 %v146, %v147
    %v149 = vmul.f32 %v148, 0.1
    %v150 = vmul.f32 %v135, %v135
    %vm151 = vcmask 125952
    %v152 = vsel %vm151, %v150, 0.0
    %v153 = vrot.slane %v152, 4
    %v154 = vadd.f32 %v152, %v153
    %v155 = vrot.slane %v154, 2
    %v156 = vadd.f32 %v154, %v155
    %v157 = vrot.slane %v156, 1
    %v158 = vadd.f32 %v156, %v157
    %v159 = vadd.f32 %v149, %v158
    %vm160 = vcmask 122880
    %161 = vst.msk [vmem:[#allocation2] sm:$0x1] %vm160, %v159
    // Predicated region
    $region14: #{tpu_custom_call.1} parent=1 // pred_check
      _
    $region15: #{tpu_custom_call.1} parent=1 // pred_check_branch
      %163 = sbr.rel (0) target = $region17
    $region16: #{tpu_custom_call.1} parent=1 // pred_region
      %s165 = ssub.s32 16, 16
      %166 = vsyncadd [#allocation3], %s165
      %s168 = sshll.u32 [#allocation2], 4
      %s169 = int_to_ptr.vmem [resolvable:$true] %s168
      %171 = dma.vmem_to_hbm [thread:$0]  %s169, 16, %s3, [#allocation3]
    $region17: #{tpu_custom_call.1} parent=1 // pred_fallthru
      _
    // Predicated region
    $region18: #{tpu_custom_call.1} parent=1 // pred_check
      _
    $region19: #{tpu_custom_call.1} parent=1 // pred_check_branch
      %173 = sbr.rel (0) target = $region21
    $region20: #{tpu_custom_call.1} parent=1 // pred_region
      %174 = dma.done [#allocation3], 16
    $region21: #{tpu_custom_call.1} parent=1 // pred_fallthru
      _
    %175 = vsyncpa [#allocation3], 1

</llo_original>
